<compile_context>
chip_gen: v5e
topology: v5e:2x2
jax: 0.10.0
libtpu: 0.0.40
codegen_flags: <defaults>
</compile_context>

<pallas_src>
import functools

import jax
import jax.numpy as jnp
from jax.experimental import pallas as pl
from jax.experimental.pallas import tpu as pltpu


def residual_block_kernel(x_ref, ctx_ref, w0_ref, b0_ref, w1_ref, b1_ref,
                          wc_ref, bc_ref, out_ref):
    x = x_ref[...]                                              # [T, 128]

    # temps = activation(inputs)
    t = jnp.tanh(x)

    # temps = linear_layers[0](temps)   (block-diagonal packed weight)
    t = jnp.dot(t, w0_ref[...], preferred_element_type=jnp.float32) + b0_ref[...]

    # temps = activation(temps)
    t = jnp.tanh(t)

    # dropout(p=0.0) in eval mode is the identity.

    # temps = linear_layers[1](temps)
    t = jnp.dot(t, w1_ref[...], preferred_element_type=jnp.float32) + b1_ref[...]

    # context_layer(context)
    c = jnp.dot(ctx_ref[...], wc_ref[...], preferred_element_type=jnp.float32) + bc_ref[...]

    # F.glu(cat([t, c], dim=1), dim=1) == t * sigmoid(c)
    t = t * jax.nn.sigmoid(c)

    # return inputs + temps
    out_ref[...] = (x + t).astype(out_ref.dtype)


def _block_diagonal(w, pack):
    """[kin, kout] -> [pack*kin, pack*kout] with `pack` copies of w on the diagonal."""
    kin, kout = w.shape
    eye = jnp.eye(pack, dtype=w.dtype)
    return jnp.einsum("pq,io->piqo", eye, w).reshape(pack * kin, pack * kout)


@functools.partial(jax.jit, static_argnames=("max_tile_rows",))
def residual_block(x, ctx, w0, b0, w1, b1, wc, bc, *, max_tile_rows=512):
    """x: [B, F] f32, ctx: [B, Fc] f32, weights stored as [in, out]."""
    B, F = x.shape
    Fc = ctx.shape[-1]
    assert 128 % F == 0, "feature width must divide 128 for lane packing"
    pack = 128 // F                      # batch rows packed per 128-lane row
    lanes = pack * F                     # == 128 (lane-dense activations/output)
    ctx_lanes = pack * Fc

    # Pack `pack` consecutive batch rows into one lane-dense row; pad the batch
    # so the packed row count divides evenly into tiles (tile rows multiple of 8).
    rows = -(-B // pack)
    tile_rows = min(max_tile_rows, ((rows + 7) // 8) * 8)
    num_tiles = pl.cdiv(rows, tile_rows)
    rows_pad = num_tiles * tile_rows
    b_pad = rows_pad * pack

    xp = jnp.zeros((b_pad, F), x.dtype).at[:B].set(x).reshape(rows_pad, lanes)
    cp = jnp.zeros((b_pad, Fc), ctx.dtype).at[:B].set(ctx).reshape(rows_pad, ctx_lanes)

    # Block-diagonal weights / tiled biases: identical math in packed layout.
    w0p = _block_diagonal(w0, pack)                       # [128, 128]
    w1p = _block_diagonal(w1, pack)                       # [128, 128]
    wcp = _block_diagonal(wc, pack)                       # [pack*Fc, 128]
    b0p = jnp.tile(b0.reshape(1, F), (1, pack))           # [1, 128]
    b1p = jnp.tile(b1.reshape(1, F), (1, pack))
    bcp = jnp.tile(bc.reshape(1, F), (1, pack))

    act_spec = pl.BlockSpec((tile_rows, lanes), lambda i: (i, 0))
    ctx_spec = pl.BlockSpec((tile_rows, ctx_lanes), lambda i: (i, 0))

    def resident(shape):
        # Constant index_map -> DMA'd once, stays VMEM-resident across the grid.
        return pl.BlockSpec(shape, lambda i: (0, 0))

    elem_bytes = jnp.dtype(x.dtype).itemsize
    cost = pl.CostEstimate(
        flops=2 * b_pad * F * (2 * F + Fc) + 4 * b_pad * F,
        transcendentals=3 * b_pad * F,
        bytes_accessed=elem_bytes * (2 * xp.size + cp.size + w0p.size + w1p.size
                                     + wcp.size + b0p.size + b1p.size + bcp.size),
    )

    out = pl.pallas_call(
        residual_block_kernel,
        out_shape=jax.ShapeDtypeStruct((rows_pad, lanes), x.dtype),
        grid=(num_tiles,),
        in_specs=[
            act_spec,                         # packed x
            ctx_spec,                         # packed ctx
            resident((lanes, lanes)),         # W0
            resident((1, lanes)),             # b0
            resident((lanes, lanes)),         # W1
            resident((1, lanes)),             # b1
            resident((ctx_lanes, lanes)),     # Wc
            resident((1, lanes)),             # bc
        ],
        out_specs=act_spec,
        compiler_params=pltpu.CompilerParams(
            dimension_semantics=("parallel",),   # shard grid across TCs on v7x
        ),
        cost_estimate=cost,
    )(xp, cp, w0p, b0p, w1p, b1p, wcp, bcp)

    # Unpack back to [B, F] (row-major reshape is free) and drop padding rows.
    return out.reshape(b_pad, F)[:B]


def init_params(key, features, context_features, dtype=jnp.float32):
    """Deterministic parameter init mimicking PyTorch defaults + zero_initialization."""
    k0w, k0b, k1w, k1b, kcw, kcb = jax.random.split(key, 6)
    bound_f = 1.0 / jnp.sqrt(features)
    bound_c = 1.0 / jnp.sqrt(context_features)
    # linear_layers[0]: default PyTorch init, stored as [in, out]
    w0 = jax.random.uniform(k0w, (features, features), dtype, -bound_f, bound_f)
    b0 = jax.random.uniform(k0b, (1, features), dtype, -bound_f, bound_f)
    # linear_layers[1]: zero_initialization => U(-0.001, 0.001)
    w1 = jax.random.uniform(k1w, (features, features), dtype, -0.001, 0.001)
    b1 = jax.random.uniform(k1b, (1, features), dtype, -0.001, 0.001)
    # context_layer: default PyTorch init
    wc = jax.random.uniform(kcw, (context_features, features), dtype, -bound_c, bound_c)
    bc = jax.random.uniform(kcb, (1, features), dtype, -bound_c, bound_c)
    return w0, b0, w1, b1, wc, bc


def reference(x, ctx, w0, b0, w1, b1, wc, bc):
    t = jnp.tanh(x)
    t = t @ w0 + b0
    t = jnp.tanh(t)
    t = t @ w1 + b1
    c = ctx @ wc + bc
    t = t * jax.nn.sigmoid(c)
    return x + t


if __name__ == "__main__":
    features = 32
    context_features = 8

    key = jax.random.PRNGKey(0)
    kx, kc, kp = jax.random.split(key, 3)
    params = init_params(kp, features, context_features)

    # Small shape (single-tile path).
    batch = 8
    x = jax.random.normal(kx, (batch, features), jnp.float32)
    ctx = jax.random.normal(kc, (batch, context_features), jnp.float32)
    out = jax.block_until_ready(residual_block(x, ctx, *params))
    ref = reference(x, ctx, *params)
    assert out.shape == (batch, features)
    assert jnp.allclose(out, ref, atol=1e-5, rtol=1e-5), "mismatch vs JAX reference (small)"

    # Multi-tile + padding path (batch not divisible by pack or tile size).
    batch2 = 100
    x2 = jax.random.normal(jax.random.fold_in(kx, 1), (batch2, features), jnp.float32)
    ctx2 = jax.random.normal(jax.random.fold_in(kc, 1), (batch2, context_features), jnp.float32)
    out2 = jax.block_until_ready(residual_block(x2, ctx2, *params, max_tile_rows=16))
    ref2 = reference(x2, ctx2, *params)
    assert out2.shape == (batch2, features)
    assert jnp.allclose(out2, ref2, atol=1e-5, rtol=1e-5), "mismatch vs JAX reference (gridded)"

    print("KERNEL_OK")
</pallas_src>

<mosaic_0001>
module attributes {stable_mosaic.version = 11 : i64} {
  func.func @residual_block_kernel(%arg0: i32, %arg1: memref<8x128xf32, #tpu.memory_space<vmem>>, %arg2: memref<8x32xf32, #tpu.memory_space<vmem>>, %arg3: memref<128x128xf32, #tpu.memory_space<vmem>>, %arg4: memref<1x128xf32, #tpu.memory_space<vmem>>, %arg5: memref<128x128xf32, #tpu.memory_space<vmem>>, %arg6: memref<1x128xf32, #tpu.memory_space<vmem>>, %arg7: memref<32x128xf32, #tpu.memory_space<vmem>>, %arg8: memref<1x128xf32, #tpu.memory_space<vmem>>, %arg9: memref<8x128xf32, #tpu.memory_space<vmem>>) attributes {dimension_semantics = [#tpu.dimension_semantics<parallel>], iteration_bounds = array<i64: 1>, scalar_prefetch = 0 : i64, scratch_operands = 0 : i64, tpu.core_type = #tpu.core_type<tc>, window_params = [{transform_indices = @transform_0, window_bounds = array<i64: 8, 128>}, {transform_indices = @transform_1, window_bounds = array<i64: 8, 32>}, {pipeline_mode = #tpu.pipeline_mode<synchronous>, transform_indices = @transform_2, window_bounds = array<i64: 128, 128>}, {pipeline_mode = #tpu.pipeline_mode<synchronous>, transform_indices = @transform_3, window_bounds = array<i64: 1, 128>}, {pipeline_mode = #tpu.pipeline_mode<synchronous>, transform_indices = @transform_4, window_bounds = array<i64: 128, 128>}, {pipeline_mode = #tpu.pipeline_mode<synchronous>, transform_indices = @transform_5, window_bounds = array<i64: 1, 128>}, {pipeline_mode = #tpu.pipeline_mode<synchronous>, transform_indices = @transform_6, window_bounds = array<i64: 32, 128>}, {pipeline_mode = #tpu.pipeline_mode<synchronous>, transform_indices = @transform_7, window_bounds = array<i64: 1, 128>}, {transform_indices = @transform_8, window_bounds = array<i64: 8, 128>}]} {
    %c0 = arith.constant 0 : index
    %c0_0 = arith.constant 0 : index
    %0 = vector.load %arg1[%c0, %c0_0] : memref<8x128xf32, #tpu.memory_space<vmem>>, vector<8x128xf32>
    %1 = math.tanh %0 : vector<8x128xf32>
    %c0_1 = arith.constant 0 : index
    %c0_2 = arith.constant 0 : index
    %2 = vector.load %arg3[%c0_1, %c0_2] : memref<128x128xf32, #tpu.memory_space<vmem>>, vector<128x128xf32>
    %cst = arith.constant dense<0.000000e+00> : vector<8x128xf32>
    %3 = tpu.matmul %1, %2, %cst {dimension_numbers = #tpu.dot_dimension_numbers<[1], [0], [0], [1], [0, 0, 1, 1], [], []>} : vector<8x128xf32>, vector<128x128xf32>, vector<8x128xf32> -> vector<8x128xf32>
    %c0_3 = arith.constant 0 : index
    %c0_4 = arith.constant 0 : index
    %4 = vector.load %arg4[%c0_3, %c0_4] : memref<1x128xf32, #tpu.memory_space<vmem>>, vector<1x128xf32>
    %5 = vector.broadcast %4 : vector<1x128xf32> to vector<8x128xf32>
    %6 = arith.addf %3, %5 : vector<8x128xf32>
    %7 = math.tanh %6 : vector<8x128xf32>
    %c0_5 = arith.constant 0 : index
    %c0_6 = arith.constant 0 : index
    %8 = vector.load %arg5[%c0_5, %c0_6] : memref<128x128xf32, #tpu.memory_space<vmem>>, vector<128x128xf32>
    %cst_7 = arith.constant dense<0.000000e+00> : vector<8x128xf32>
    %9 = tpu.matmul %7, %8, %cst_7 {dimension_numbers = #tpu.dot_dimension_numbers<[1], [0], [0], [1], [0, 0, 1, 1], [], []>} : vector<8x128xf32>, vector<128x128xf32>, vector<8x128xf32> -> vector<8x128xf32>
    %c0_8 = arith.constant 0 : index
    %c0_9 = arith.constant 0 : index
    %10 = vector.load %arg6[%c0_8, %c0_9] : memref<1x128xf32, #tpu.memory_space<vmem>>, vector<1x128xf32>
    %11 = vector.broadcast %10 : vector<1x128xf32> to vector<8x128xf32>
    %12 = arith.addf %9, %11 : vector<8x128xf32>
    %c0_10 = arith.constant 0 : index
    %c0_11 = arith.constant 0 : index
    %13 = vector.load %arg2[%c0_10, %c0_11] : memref<8x32xf32, #tpu.memory_space<vmem>>, vector<8x32xf32>
    %c0_12 = arith.constant 0 : index
    %c0_13 = arith.constant 0 : index
    %14 = vector.load %arg7[%c0_12, %c0_13] : memref<32x128xf32, #tpu.memory_space<vmem>>, vector<32x128xf32>
    %cst_14 = arith.constant dense<0.000000e+00> : vector<8x128xf32>
    %15 = tpu.matmul %13, %14, %cst_14 {dimension_numbers = #tpu.dot_dimension_numbers<[1], [0], [0], [1], [0, 0, 1, 1], [], []>} : vector<8x32xf32>, vector<32x128xf32>, vector<8x128xf32> -> vector<8x128xf32>
    %c0_15 = arith.constant 0 : index
    %c0_16 = arith.constant 0 : index
    %16 = vector.load %arg8[%c0_15, %c0_16] : memref<1x128xf32, #tpu.memory_space<vmem>>, vector<1x128xf32>
    %17 = vector.broadcast %16 : vector<1x128xf32> to vector<8x128xf32>
    %18 = arith.addf %15, %17 : vector<8x128xf32>
    %19 = arith.negf %18 : vector<8x128xf32>
    %20 = math.exp %19 : vector<8x128xf32>
    %cst_17 = arith.constant 1.000000e+00 : f32
    %21 = vector.broadcast %cst_17 : f32 to vector<8x128xf32>
    %22 = arith.addf %21, %20 : vector<8x128xf32>
    %23 = arith.divf %21, %22 : vector<8x128xf32>
    %24 = arith.mulf %12, %23 : vector<8x128xf32>
    %25 = arith.addf %0, %24 : vector<8x128xf32>
    %c0_18 = arith.constant 0 : index
    %c0_19 = arith.constant 0 : index
    %26 = vector.load %arg9[%c0_18, %c0_19] : memref<8x128xf32, #tpu.memory_space<vmem>>, vector<8x128xf32>
    tpu.vector_store %arg9[%c0_18, %c0_19], %25 {strides = array<i32>} : memref<8x128xf32, #tpu.memory_space<vmem>>, vector<8x128xf32>,
    return
  }
  func.func @transform_0(%arg0: i32) -> (i32, i32) {
    %c0_i32 = arith.constant 0 : i32
    %c0_i32_0 = arith.constant 0 : i32
    return %arg0, %c0_i32 : i32, i32
  }
  func.func @transform_1(%arg0: i32) -> (i32, i32) {
    %c0_i32 = arith.constant 0 : i32
    %c0_i32_0 = arith.constant 0 : i32
    return %arg0, %c0_i32 : i32, i32
  }
  func.func @transform_2(%arg0: i32) -> (i32, i32) {
    %c0_i32 = arith.constant 0 : i32
    %c0_i32_0 = arith.constant 0 : i32
    %c0_i32_1 = arith.constant 0 : i32
    return %c0_i32, %c0_i32_0 : i32, i32
  }
  func.func @transform_3(%arg0: i32) -> (i32, i32) {
    %c0_i32 = arith.constant 0 : i32
    %c0_i32_0 = arith.constant 0 : i32
    %c0_i32_1 = arith.constant 0 : i32
    return %c0_i32, %c0_i32_0 : i32, i32
  }
  func.func @transform_4(%arg0: i32) -> (i32, i32) {
    %c0_i32 = arith.constant 0 : i32
    %c0_i32_0 = arith.constant 0 : i32
    %c0_i32_1 = arith.constant 0 : i32
    return %c0_i32, %c0_i32_0 : i32, i32
  }
  func.func @transform_5(%arg0: i32) -> (i32, i32) {
    %c0_i32 = arith.constant 0 : i32
    %c0_i32_0 = arith.constant 0 : i32
    %c0_i32_1 = arith.constant 0 : i32
    return %c0_i32, %c0_i32_0 : i32, i32
  }
  func.func @transform_6(%arg0: i32) -> (i32, i32) {
    %c0_i32 = arith.constant 0 : i32
    %c0_i32_0 = arith.constant 0 : i32
    %c0_i32_1 = arith.constant 0 : i32
    return %c0_i32, %c0_i32_0 : i32, i32
  }
  func.func @transform_7(%arg0: i32) -> (i32, i32) {
    %c0_i32 = arith.constant 0 : i32
    %c0_i32_0 = arith.constant 0 : i32
    %c0_i32_1 = arith.constant 0 : i32
    return %c0_i32, %c0_i32_0 : i32, i32
  }
  func.func @transform_8(%arg0: i32) -> (i32, i32) {
    %c0_i32 = arith.constant 0 : i32
    %c0_i32_0 = arith.constant 0 : i32
    return %arg0, %c0_i32 : i32, i32
  }
}

</mosaic_0001>

<llo_original>
// kernel: residual_block.1
$region0: #{residual_block.1}
  #allocation0 [shape = 'u32[]', space=smem, size = 0x4, offset = 0x4, fixed_abs, tag = 'smem constant byte address 0x4 - core index']
  #allocation1 [shape = 'u32[72,128]{1,0:T(1,128)}', space=vmem, size = 0x9000, scoped, tag = 'internal scratch']
  %s0 = inlined_call_operand.vmem [shape: f32[8,128], index: 0, kind: input, shape index: {}]
  %s1 = inlined_call_operand.vmem [shape: f32[8,32], index: 1, kind: input, shape index: {}]
  %s2 = inlined_call_operand.vmem [shape: f32[128,128], index: 2, kind: input, shape index: {}]
  %s3 = inlined_call_operand.vmem [shape: f32[1,128], index: 3, kind: input, shape index: {}]
  %s4 = inlined_call_operand.vmem [shape: f32[128,128], index: 4, kind: input, shape index: {}]
  %s5 = inlined_call_operand.vmem [shape: f32[1,128], index: 5, kind: input, shape index: {}]
  %s6 = inlined_call_operand.vmem [shape: f32[32,128], index: 6, kind: input, shape index: {}]
  %s7 = inlined_call_operand.vmem [shape: f32[1,128], index: 7, kind: input, shape index: {}]
  %s8 = inlined_call_operand.vmem [shape: f32[8,128], index: 8, kind: output, shape index: {}]
  %s9 = sld [smem:[#allocation0]]
  $region42: #{residual_block.1} parent=0
    _
  %s11 = ssub.s32 1, %s9
  %s12 = scalar_select 0, %s11, %s9
  // Predicated region
  $region2: #{residual_block.1} parent=0 // pred_check
    _
  $region3: #{residual_block.1} parent=0 // pred_check_branch
    %14 = sbr.rel (0) target = $region5
  $region4: #{residual_block.1} parent=0 // pred_region
    _
  $region5: #{residual_block.1} parent=0 // pred_fallthru
    _
  // Predicated region
  $region6: #{residual_block.1} parent=0 // pred_check
    _
  $region7: #{residual_block.1} parent=0 // pred_check_branch
    %16 = sbr.rel (0) target = $region9
  $region8: #{residual_block.1} parent=0 // pred_region
    _
  $region9: #{residual_block.1} parent=0 // pred_fallthru
    _
  // Predicated region
  $region10: #{residual_block.1} parent=0 // pred_check
    _
  $region11: #{residual_block.1} parent=0 // pred_check_branch
    %18 = sbr.rel (0) target = $region13
  $region12: #{residual_block.1} parent=0 // pred_region
    _
  $region13: #{residual_block.1} parent=0 // pred_fallthru
    _
  // Predicated region
  $region14: #{residual_block.1} parent=0 // pred_check
    _
  $region15: #{residual_block.1} parent=0 // pred_check_branch
    %20 = sbr.rel (0) target = $region17
  $region16: #{residual_block.1} parent=0 // pred_region
    _
  $region17: #{residual_block.1} parent=0 // pred_fallthru
    _
  // Predicated region
  $region18: #{residual_block.1} parent=0 // pred_check
    _
  $region19: #{residual_block.1} parent=0 // pred_check_branch
    %22 = sbr.rel (0) target = $region21
  $region20: #{residual_block.1} parent=0 // pred_region
    _
  $region21: #{residual_block.1} parent=0 // pred_fallthru
    _
  // Predicated region
  $region22: #{residual_block.1} parent=0 // pred_check
    _
  $region23: #{residual_block.1} parent=0 // pred_check_branch
    %24 = sbr.rel (0) target = $region25
  $region24: #{residual_block.1} parent=0 // pred_region
    _
  $region25: #{residual_block.1} parent=0 // pred_fallthru
    _
  // Predicated region
  $region26: #{residual_block.1} parent=0 // pred_check
    _
  $region27: #{residual_block.1} parent=0 // pred_check_branch
    %26 = sbr.rel (0) target = $region29
  $region28: #{residual_block.1} parent=0 // pred_region
    _
  $region29: #{residual_block.1} parent=0 // pred_fallthru
    _
  // Predicated region
  $region30: #{residual_block.1} parent=0 // pred_check
    _
  $region31: #{residual_block.1} parent=0 // pred_check_branch
    %28 = sbr.rel (0) target = $region33
  $region32: #{residual_block.1} parent=0 // pred_region
    _
  $region33: #{residual_block.1} parent=0 // pred_fallthru
    _
  %v29 = vld [vmem:[%s0] sm:$0xff]
  %v30 = vtanh.pop %v29
  %v31 = vld [vmem:[%s2] sm:$0xff]
  %v32 = vld [vmem:[%s2 + $0x8] sm:$0xff]
  %v33 = vld [vmem:[%s2 + $0x10] sm:$0xff]
  %v34 = vld [vmem:[%s2 + $0x18] sm:$0xff]
  %v35 = vld [vmem:[%s2 + $0x20] sm:$0xff]
  %v36 = vld [vmem:[%s2 + $0x28] sm:$0xff]
  %v37 = vld [vmem:[%s2 + $0x30] sm:$0xff]
  %v38 = vld [vmem:[%s2 + $0x38] sm:$0xff]
  %v39 = vld [vmem:[%s2 + $0x40] sm:$0xff]
  %v40 = vld [vmem:[%s2 + $0x48] sm:$0xff]
  %v41 = vld [vmem:[%s2 + $0x50] sm:$0xff]
  %v42 = vld [vmem:[%s2 + $0x58] sm:$0xff]
  %v43 = vld [vmem:[%s2 + $0x60] sm:$0xff]
  %v44 = vld [vmem:[%s2 + $0x68] sm:$0xff]
  %v45 = vld [vmem:[%s2 + $0x70] sm:$0xff]
  %v46 = vld [vmem:[%s2 + $0x78] sm:$0xff]
  %v47 = vld [vmem:[%s3] sm:$0x1]
  %v49 = vperm.slane %v47, 0
  %51 = vmatpush.msra.mxu0 %v46
  %52 = vmatpush.msra.mxu0 %v45
  %53 = vmatpush.msra.mxu0 %v44
  %54 = vmatpush.msra.mxu0 %v43
  %55 = vmatpush.msra.mxu0 %v42
  %56 = vmatpush.msra.mxu0 %v41
  %57 = vmatpush.msra.mxu0 %v40
  %58 = vmatpush.msra.mxu0 %v39
  %59 = vmatpush.msra.mxu0 %v38
  %60 = vmatpush.msra.mxu0 %v37
  %61 = vmatpush.msra.mxu0 %v36
  %62 = vmatpush.msra.mxu0 %v35
  %63 = vmatpush.msra.mxu0 %v34
  %64 = vmatpush.msra.mxu0 %v33
  %65 = vmatpush.msra.mxu0 %v32
  %66 = vmatpush.msra.mxu0 %v31
  %67 = vmatmul.f32.gmra.mxu0 %v30
  %v68 = vpop.f32.mrf.mxu0
  %v69 = vadd.f32 %v49, %v68
  %70 = vdwg.mxu0
  %v71 = vtanh.pop %v69
  %v72 = vld [vmem:[%s4] sm:$0xff]
  %v73 = vld [vmem:[%s4 + $0x8] sm:$0xff]
  %v74 = vld [vmem:[%s4 + $0x10] sm:$0xff]
  %v75 = vld [vmem:[%s4 + $0x18] sm:$0xff]
  %v76 = vld [vmem:[%s4 + $0x20] sm:$0xff]
  %v77 = vld [vmem:[%s4 + $0x28] sm:$0xff]
  %v78 = vld [vmem:[%s4 + $0x30] sm:$0xff]
  %v79 = vld [vmem:[%s4 + $0x38] sm:$0xff]
  %v80 = vld [vmem:[%s4 + $0x40] sm:$0xff]
  %v81 = vld [vmem:[%s4 + $0x48] sm:$0xff]
  %v82 = vld [vmem:[%s4 + $0x50] sm:$0xff]
  %v83 = vld [vmem:[%s4 + $0x58] sm:$0xff]
  %v84 = vld [vmem:[%s4 + $0x60] sm:$0xff]
  %v85 = vld [vmem:[%s4 + $0x68] sm:$0xff]
  %v86 = vld [vmem:[%s4 + $0x70] sm:$0xff]
  %v87 = vld [vmem:[%s4 + $0x78] sm:$0xff]
  %v88 = vld [vmem:[%s5] sm:$0x1]
  %v90 = vperm.slane %v88, 0
  %92 = vmatpush.msra.mxu0 %v87
  %93 = vmatpush.msra.mxu0 %v86
  %94 = vmatpush.msra.mxu0 %v85
  %95 = vmatpush.msra.mxu0 %v84
  %96 = vmatpush.msra.mxu0 %v83
  %97 = vmatpush.msra.mxu0 %v82
  %98 = vmatpush.msra.mxu0 %v81
  %99 = vmatpush.msra.mxu0 %v80
  %100 = vmatpush.msra.mxu0 %v79
  %101 = vmatpush.msra.mxu0 %v78
  %102 = vmatpush.msra.mxu0 %v77
  %103 = vmatpush.msra.mxu0 %v76
  %104 = vmatpush.msra.mxu0 %v75
  %105 = vmatpush.msra.mxu0 %v74
  %106 = vmatpush.msra.mxu0 %v73
  %107 = vmatpush.msra.mxu0 %v72
  %108 = vmatmul.f32.gmra.mxu0 %v71
  %v109 = vpop.f32.mrf.mxu0
  %v110 = vadd.f32 %v90, %v109
  %111 = vdwg.mxu0
  %v112 = vld [vmem:[%s1] sm:$0xff]
  %v113 = vld [vmem:[%s6] sm:$0xff]
  %v114 = vld [vmem:[%s6 + $0x8] sm:$0xff]
  %v115 = vld [vmem:[%s6 + $0x10] sm:$0xff]
  %v116 = vld [vmem:[%s6 + $0x18] sm:$0xff]
  %v117 = vld [vmem:[%s7] sm:$0x1]
  %v119 = vperm.slane %v117, 0
  %vm121 = vcmask 261120
  %v123 = vsel %vm121, %v112, 0
  %125 = vmatpush.msra.mxu0 0.0
  %126 = vmatpush.msra.mxu0 0.0
  %127 = vmatpush.msra.mxu0 0.0
  %128 = vmatpush.msra.mxu0 0.0
  %129 = vmatpush.msra.mxu0 0.0
  %130 = vmatpush.msra.mxu0 0.0
  %131 = vmatpush.msra.mxu0 0.0
  %132 = vmatpush.msra.mxu0 0.0
  %133 = vmatpush.msra.mxu0 0.0
  %134 = vmatpush.msra.mxu0 0.0
  %135 = vmatpush.msra.mxu0 0.0
  %136 = vmatpush.msra.mxu0 0.0
  %137 = vmatpush.msra.mxu0 %v116
  %138 = vmatpush.msra.mxu0 %v115
  %139 = vmatpush.msra.mxu0 %v114
  %140 = vmatpush.msra.mxu0 %v113
  %141 = vmatmul.f32.gmra.mxu0 %v123
  %v142 = vpop.f32.mrf.mxu0
  %v143 = vadd.f32 %v119, %v142
  %144 = vdwg.mxu0
  %v145 = vxor.u32 %v143, 2147483648
  %v146 = vmul.f32 %v145, 1.442695
  %v147 = vpow.pop %v146
  %v148 = vadd.f32 %v147, 1.0
  %v149 = vrcp.pop %v148
  %v150 = vmul.f32 %v148, %v149
  %v151 = vsub.f32 1.0, %v150
  %v152 = vmul.f32 %v149, %v151
  %v153 = vadd.f32 %v149, %v152
  %vm154 = vweird.f32 %v148
  %vm155 = vweird.f32 %v149
  %vm156 = vmor %vm154, %vm155
  %v157 = vsel %vm156, %v149, %v153
  %v158 = vand.u32 2147483647, %v148
  %vm159 = vcmp.eq.f32.partialorder %v158, 8.507059e+37
  %v160 = vand.u32 %v148, 2147483648
  %v161 = vor.u32 1.1754944e-38, %v160
  %v162 = vsel %vm159, %v161, %v157
  %v163 = vmul.f32 1.0, %v162
  %v164 = vmul.f32 %v110, %v163
  %v165 = vadd.f32 %v29, %v164
  %166 = vst [vmem:[%s8] sm:$0xff] %v165
  // Predicated region
  $region34: #{residual_block.1} parent=0 // pred_check
    _
  $region35: #{residual_block.1} parent=0 // pred_check_branch
    %168 = sbr.rel (0) target = $region37
  $region36: #{residual_block.1} parent=0 // pred_region
    _
  $region37: #{residual_block.1} parent=0 // pred_fallthru
    _
  // Predicated region
  $region38: #{residual_block.1} parent=0 // pred_check
    _
  $region39: #{residual_block.1} parent=0 // pred_check_branch
    %170 = sbr.rel (0) target = $region41
  $region40: #{residual_block.1} parent=0 // pred_region
    _
  $region41: #{residual_block.1} parent=0 // pred_fallthru
    _

</llo_original>
